<compile_context>
chip_gen: v7x
topology: tpu7x:2x2x1
jax: 0.10.0
libtpu: 0.0.40
codegen_flags: <defaults>
</compile_context>

<pallas_src>
import jax
import jax.numpy as jnp
from jax.experimental import pallas as pl
from jax.experimental.pallas import tpu as pltpu


def _round_up(n, m):
    return (n + m - 1) // m * m


def _mlp_kernel(x_ref, w1_ref, b1_ref, w2_ref, b2_ref, o_ref):
    # MXU-feed cast happens in-kernel (cheap VPU work hidden under the matmul)
    # so the wrapper never writes a casted copy of x back to HBM.
    x = x_ref[...].astype(w1_ref.dtype)
    h = jnp.dot(x, w1_ref[...], preferred_element_type=jnp.float32)   # MXU, f32 acc
    h = jnp.maximum(h + b1_ref[...], 0.0)                             # bias+ReLU, f32 VPU
    y = jnp.dot(h.astype(w2_ref.dtype), w2_ref[...],
                preferred_element_type=jnp.float32)
    y = jnp.maximum(y + b2_ref[...], 0.0)
    o_ref[...] = y.astype(o_ref.dtype)


def product_tower_mlp(x, w1, b1, w2, b2, *, compute_dtype=None,
                      pack_factor=None, tile_rows=None):
    """Fused 2-layer MLP (Linear -> ReLU -> Linear -> ReLU), Pallas TPU kernel.

    x:  (..., input_dim)   w1: (input_dim, embed_dim)   b1: (embed_dim,)
                           w2: (embed_dim, output_dim)  b2: (output_dim,)
    compute_dtype: e.g. jnp.bfloat16 — re-types the resident weights and the
        in-kernel MXU feed only (x stays as given in HBM; accumulation f32).
    pack_factor: override the block-diagonal row-group size k (None = auto,
        1 = disable).  On v5e you may prefer a smaller k so k*input_dim <= 128.
    """
    orig_lead = x.shape[:-1]
    input_dim, embed_dim = w1.shape
    output_dim = w2.shape[1]
    x2 = x.reshape(-1, input_dim)
    B = x2.shape[0]
    out_dtype = x.dtype

    w_dtype = compute_dtype if compute_dtype is not None else w1.dtype
    w1c = w1.astype(w_dtype)
    w2c = w2.astype(w_dtype)
    w_item = jnp.dtype(w_dtype).itemsize
    x_item = jnp.dtype(x2.dtype).itemsize
    out_item = jnp.dtype(out_dtype).itemsize

    # ---- block-diagonal row-group pack factor k -----------------------------
    if pack_factor is None:
        k = 128 // output_dim if (output_dim < 128 and 128 % output_dim == 0) else 1
    else:
        k = max(1, int(pack_factor))
    if k > 1 and B % k != 0:
        k = 1                                   # ragged group -> plain layout fallback
    if k > 1:
        bd_w_bytes = 2 * k * k * (input_dim * embed_dim + embed_dim * output_dim) * w_item
        if bd_w_bytes > (12 << 20):             # repacked weights must stay VMEM-resident
            k = 1

    # ---- build kernel operands ----------------------------------------------
    # NOTE: with k > 1 a grouped row holds k samples; cross-sample weight
    # entries are exact zeros, so numerics match the per-sample MLP for finite
    # inputs.  Callers with static params should jit/pre-pack so the (tiny)
    # kron repack below is folded rather than re-emitted per step.
    if k > 1:
        rows = B // k
        kin, hid, nout = k * input_dim, k * embed_dim, k * output_dim
        x_in = x2.reshape(rows, kin)                          # free row-major view
        eye = jnp.eye(k, dtype=w_dtype)
        w1_in = jnp.kron(eye, w1c)                            # (kin, hid) block-diag
        w2_in = jnp.kron(eye, w2c)                            # (hid, nout), nout = 128
        b1_in = jnp.tile(b1.astype(jnp.float32), k).reshape(1, hid)
        b2_in = jnp.tile(b2.astype(jnp.float32), k).reshape(1, nout)
    else:
        rows = B
        kin, hid, nout = input_dim, embed_dim, output_dim
        x_in, w1_in, w2_in = x2, w1c, w2c
        b1_in = b1.astype(jnp.float32).reshape(1, hid)
        b2_in = b2.astype(jnp.float32).reshape(1, nout)

    # ---- batch tile selection ------------------------------------------------
    sub = 16 if min(w_item, x_item, out_item) < 4 else 8      # sublane packing for <32-bit
    if tile_rows is not None:
        tile = _round_up(int(tile_rows), sub)
        if tile >= rows:
            tile = rows
    elif rows <= 128:
        tile = rows                                           # one full block (no 8-row constraint)
    elif rows <= 512:
        tile = _round_up(pl.cdiv(rows, 2), sub)               # 2 tiles -> both v7x TCs, pipelined
    else:
        steps = max(4, pl.cdiv(rows, 512))                    # cap ~512 rows/tile, >=4 steps
        steps += steps % 2                                    # even step count (v7x TC balance)
        tile = _round_up(pl.cdiv(rows, steps), sub)

    # ---- VMEM budget guard + explicit limit -----------------------------------
    def _tile_bytes(t):
        return t * (2 * kin * x_item          # x tile, double-buffered
                    + 2 * nout * out_item     # out tile, double-buffered
                    + kin * w_item            # in-kernel x cast
                    + hid * (4 + w_item)      # f32 hidden + cast for 2nd dot
                    + nout * 4)               # f32 pre-store output
    weight_bytes = 2 * (kin * hid + hid * nout) * w_item + 2 * (hid + nout) * 4
    VMEM_BUDGET = 20 << 20                                    # safe on v5e/v6e/v7x
    while tile > sub and _tile_bytes(tile) + weight_bytes > VMEM_BUDGET:
        tile = max(sub, _round_up(tile // 2, sub))
    if tile >= rows:
        tile = rows
    grid = (pl.cdiv(rows, tile),)                             # last block clipped by Pallas
    vmem_need = _tile_bytes(tile) + weight_bytes
    vmem_limit = int(min(max(vmem_need + (8 << 20), 16 << 20), 48 << 20))

    cost = pl.CostEstimate(
        flops=2 * B * (input_dim * embed_dim + embed_dim * output_dim),
        transcendentals=0,
        bytes_accessed=(B * input_dim * x_item
                        + (kin * hid + hid * nout) * w_item
                        + (hid + nout) * 4
                        + B * output_dim * out_item),
    )

    out = pl.pallas_call(
        _mlp_kernel,
        out_shape=jax.ShapeDtypeStruct((rows, nout), out_dtype),
        grid_spec=pltpu.PrefetchScalarGridSpec(
            num_scalar_prefetch=0,
            grid=grid,
            in_specs=[
                pl.BlockSpec((tile, kin), lambda i: (i, 0)),   # x rows (streamed)
                pl.BlockSpec((kin, hid), lambda i: (0, 0)),    # W1 (resident)
                pl.BlockSpec((1, hid), lambda i: (0, 0)),      # b1
                pl.BlockSpec((hid, nout), lambda i: (0, 0)),   # W2 (resident)
                pl.BlockSpec((1, nout), lambda i: (0, 0)),     # b2
            ],
            out_specs=pl.BlockSpec((tile, nout), lambda i: (i, 0)),
        ),
        compiler_params=pltpu.CompilerParams(
            dimension_semantics=("parallel",),                 # batch tiles independent
            vmem_limit_bytes=vmem_limit,
        ),
        cost_estimate=cost,
    )(x_in, w1_in, b1_in, w2_in, b2_in)

    # (rows, nout) is the row-major view of (B, output_dim); reshape is free.
    return out.reshape(orig_lead + (output_dim,))


if __name__ == "__main__":
    # ProductTower_MLP(input_dim=32, embed_dim=64, output_dim=16)
    input_dim, embed_dim, output_dim = 32, 64, 16

    key = jax.random.PRNGKey(0)
    kx, k1, k2, k3, k4 = jax.random.split(key, 5)
    bound1 = 1.0 / (input_dim ** 0.5)
    w1 = jax.random.uniform(k1, (input_dim, embed_dim), jnp.float32, -bound1, bound1)
    b1 = jax.random.uniform(k2, (embed_dim,), jnp.float32, -bound1, bound1)
    bound2 = 1.0 / (embed_dim ** 0.5)
    w2 = jax.random.uniform(k3, (embed_dim, output_dim), jnp.float32, -bound2, bound2)
    b2 = jax.random.uniform(k4, (output_dim,), jnp.float32, -bound2, bound2)

    def reference(xin):
        h = jnp.maximum(xin @ w1 + b1, 0.0)
        return jnp.maximum(h @ w2 + b2, 0.0)

    # B=256: block-diag (lane-dense) path, single tile.
    x256 = jax.random.normal(kx, (256, input_dim), dtype=jnp.float32)
    out256 = jax.block_until_ready(product_tower_mlp(x256, w1, b1, w2, b2))
    assert out256.shape == (256, output_dim)
    assert jnp.allclose(out256, reference(x256), atol=1e-5, rtol=1e-5), "mismatch B=256"

    # Ragged / odd batches:
    #   200 -> still %8==0, stays on the packed path (no padding, no slicing)
    #   203 -> plain-layout fallback with a Pallas-clipped last grid block
    #     8 -> tiny single-tile packed path
    #  8192 -> >=4 even grid steps, 256-row grouped tiles (pipelined)
    for B in (200, 203, 8, 8192):
        xb = jax.random.normal(jax.random.fold_in(kx, B), (B, input_dim), jnp.float32)
        ob = jax.block_until_ready(product_tower_mlp(xb, w1, b1, w2, b2))
        assert ob.shape == (B, output_dim)
        assert jnp.allclose(ob, reference(xb), atol=1e-5, rtol=1e-5), f"mismatch B={B}"

    # Arbitrary leading batch dims, like nn.Linear.
    x3 = jax.random.normal(jax.random.fold_in(kx, 777), (2, 4, input_dim), jnp.float32)
    o3 = jax.block_until_ready(product_tower_mlp(x3, w1, b1, w2, b2))
    assert o3.shape == (2, 4, output_dim)
    assert jnp.allclose(o3, reference(x3), atol=1e-5, rtol=1e-5), "mismatch 3-D input"

    # bf16 MXU feed (v6e/v7x): weights re-typed in the wrapper, x cast in-kernel,
    # f32 accumulation keeps accuracy; loose tolerance vs the f32 reference.
    out_bf16 = jax.block_until_ready(
        product_tower_mlp(x256, w1, b1, w2, b2, compute_dtype=jnp.bfloat16))
    assert out_bf16.shape == (256, output_dim)
    assert jnp.allclose(out_bf16, reference(x256), atol=5e-2, rtol=5e-2), "mismatch bf16"

    print("KERNEL_OK")
</pallas_src>

<mosaic_0001>
module attributes {stable_mosaic.version = 11 : i64} {
  func.func @_mlp_kernel(%arg0: i32, %arg1: memref<32x256xf32, #tpu.memory_space<vmem>>, %arg2: memref<256x512xf32, #tpu.memory_space<vmem>>, %arg3: memref<1x512xf32, #tpu.memory_space<vmem>>, %arg4: memref<512x128xf32, #tpu.memory_space<vmem>>, %arg5: memref<1x128xf32, #tpu.memory_space<vmem>>, %arg6: memref<32x128xf32, #tpu.memory_space<vmem>>) attributes {dimension_semantics = [#tpu.dimension_semantics<parallel>], iteration_bounds = array<i64: 1>, scalar_prefetch = 0 : i64, scratch_operands = 0 : i64, tpu.core_type = #tpu.core_type<tc>, window_params = [{transform_indices = @transform_0, window_bounds = array<i64: 32, 256>}, {pipeline_mode = #tpu.pipeline_mode<synchronous>, transform_indices = @transform_1, window_bounds = array<i64: 256, 512>}, {pipeline_mode = #tpu.pipeline_mode<synchronous>, transform_indices = @transform_2, window_bounds = array<i64: 1, 512>}, {pipeline_mode = #tpu.pipeline_mode<synchronous>, transform_indices = @transform_3, window_bounds = array<i64: 512, 128>}, {pipeline_mode = #tpu.pipeline_mode<synchronous>, transform_indices = @transform_4, window_bounds = array<i64: 1, 128>}, {transform_indices = @transform_5, window_bounds = array<i64: 32, 128>}]} {
    %c0 = arith.constant 0 : index
    %c0_0 = arith.constant 0 : index
    %0 = vector.load %arg1[%c0, %c0_0] : memref<32x256xf32, #tpu.memory_space<vmem>>, vector<32x256xf32>
    %c0_1 = arith.constant 0 : index
    %c0_2 = arith.constant 0 : index
    %1 = vector.load %arg2[%c0_1, %c0_2] : memref<256x512xf32, #tpu.memory_space<vmem>>, vector<256x512xf32>
    %cst = arith.constant dense<0.000000e+00> : vector<32x512xf32>
    %2 = tpu.matmul %0, %1, %cst {dimension_numbers = #tpu.dot_dimension_numbers<[1], [0], [0], [1], [0, 0, 1, 1], [], []>} : vector<32x256xf32>, vector<256x512xf32>, vector<32x512xf32> -> vector<32x512xf32>
    %c0_3 = arith.constant 0 : index
    %c0_4 = arith.constant 0 : index
    %3 = vector.load %arg3[%c0_3, %c0_4] : memref<1x512xf32, #tpu.memory_space<vmem>>, vector<1x512xf32>
    %4 = vector.broadcast %3 : vector<1x512xf32> to vector<32x512xf32>
    %5 = arith.addf %2, %4 : vector<32x512xf32>
    %cst_5 = arith.constant 0.000000e+00 : f32
    %6 = vector.broadcast %cst_5 : f32 to vector<32x512xf32>
    %7 = arith.maximumf %5, %6 : vector<32x512xf32>
    %c0_6 = arith.constant 0 : index
    %c0_7 = arith.constant 0 : index
    %8 = vector.load %arg4[%c0_6, %c0_7] : memref<512x128xf32, #tpu.memory_space<vmem>>, vector<512x128xf32>
    %cst_8 = arith.constant dense<0.000000e+00> : vector<32x128xf32>
    %9 = tpu.matmul %7, %8, %cst_8 {dimension_numbers = #tpu.dot_dimension_numbers<[1], [0], [0], [1], [0, 0, 1, 1], [], []>} : vector<32x512xf32>, vector<512x128xf32>, vector<32x128xf32> -> vector<32x128xf32>
    %c0_9 = arith.constant 0 : index
    %c0_10 = arith.constant 0 : index
    %10 = vector.load %arg5[%c0_9, %c0_10] : memref<1x128xf32, #tpu.memory_space<vmem>>, vector<1x128xf32>
    %11 = vector.broadcast %10 : vector<1x128xf32> to vector<32x128xf32>
    %12 = arith.addf %9, %11 : vector<32x128xf32>
    %cst_11 = arith.constant 0.000000e+00 : f32
    %13 = vector.broadcast %cst_11 : f32 to vector<32x128xf32>
    %14 = arith.maximumf %12, %13 : vector<32x128xf32>
    %c0_12 = arith.constant 0 : index
    %c0_13 = arith.constant 0 : index
    %15 = vector.load %arg6[%c0_12, %c0_13] : memref<32x128xf32, #tpu.memory_space<vmem>>, vector<32x128xf32>
    tpu.vector_store %arg6[%c0_12, %c0_13], %14 {strides = array<i32>} : memref<32x128xf32, #tpu.memory_space<vmem>>, vector<32x128xf32>,
    return
  }
  func.func @transform_0(%arg0: i32) -> (i32, i32) {
    %c0_i32 = arith.constant 0 : i32
    %c0_i32_0 = arith.constant 0 : i32
    return %arg0, %c0_i32 : i32, i32
  }
  func.func @transform_1(%arg0: i32) -> (i32, i32) {
    %c0_i32 = arith.constant 0 : i32
    %c0_i32_0 = arith.constant 0 : i32
    %c0_i32_1 = arith.constant 0 : i32
    return %c0_i32, %c0_i32_0 : i32, i32
  }
  func.func @transform_2(%arg0: i32) -> (i32, i32) {
    %c0_i32 = arith.constant 0 : i32
    %c0_i32_0 = arith.constant 0 : i32
    %c0_i32_1 = arith.constant 0 : i32
    return %c0_i32, %c0_i32_0 : i32, i32
  }
  func.func @transform_3(%arg0: i32) -> (i32, i32) {
    %c0_i32 = arith.constant 0 : i32
    %c0_i32_0 = arith.constant 0 : i32
    %c0_i32_1 = arith.constant 0 : i32
    return %c0_i32, %c0_i32_0 : i32, i32
  }
  func.func @transform_4(%arg0: i32) -> (i32, i32) {
    %c0_i32 = arith.constant 0 : i32
    %c0_i32_0 = arith.constant 0 : i32
    %c0_i32_1 = arith.constant 0 : i32
    return %c0_i32, %c0_i32_0 : i32, i32
  }
  func.func @transform_5(%arg0: i32) -> (i32, i32) {
    %c0_i32 = arith.constant 0 : i32
    %c0_i32_0 = arith.constant 0 : i32
    return %arg0, %c0_i32 : i32, i32
  }
}

</mosaic_0001>

<llo_original>
// kernel: tpu_custom_call.1
$region0: #{tpu_custom_call.1}
  #allocation0 [shape = 'u32[]', space=smem, size = 0x4, offset = 0x4, fixed_abs, tag = 'smem constant byte address 0x4 - core index']
  #allocation1 [shape = 'u32[144,128]{1,0:T(1,128)}', space=vmem, size = 0x12000, scoped, tag = 'internal scratch']
  %s0 = inlined_call_operand.hbm [shape: f32[32,256], index: 0, kind: input, shape index: {}]
  %s1 = inlined_call_operand.hbm [shape: f32[256,512], index: 1, kind: input, shape index: {}]
  %s2 = inlined_call_operand.vmem [shape: f32[1,512], index: 2, kind: input, shape index: {}]
  %s3 = inlined_call_operand.hbm [shape: f32[512,128], index: 3, kind: input, shape index: {}]
  %s4 = inlined_call_operand.vmem [shape: f32[1,128], index: 4, kind: input, shape index: {}]
  %s5 = inlined_call_operand.hbm [shape: f32[32,128], index: 5, kind: output, shape index: {}]
  %s6 = sld [smem:[#allocation0]]
  $region42: #{tpu_custom_call.1} parent=0
    _
  %s8 = ssub.s32 1, %s6
  %s9 = scalar_select 0, %s8, %s6
  $region1: #{tpu_custom_call.1} parent=0
    #allocation2 [shape = 'u8[32768]{0}', space=vmem, size = 0x8000, scoped, tag = 'input window, operand 0, single buffered']
    #allocation3 [shape = 's32[1]{0}', space=sflag, size = 0x4, scoped, tag = 'scoped memory for tpu_custom_call.1']
    #allocation4 [shape = 's32[1]{0}', space=sflag, size = 0x4, scoped, tag = 'scoped memory for tpu_custom_call.1']
    #allocation5 [shape = 'u8[524288]{0}', space=vmem, size = 0x80000, scoped, tag = 'input window, operand 1, single buffered']
    #allocation6 [shape = 's32[1]{0}', space=sflag, size = 0x4, scoped, tag = 'scoped memory for tpu_custom_call.1']
    #allocation7 [shape = 'u8[262144]{0}', space=vmem, size = 0x40000, scoped, tag = 'input window, operand 3, single buffered']
    #allocation8 [shape = 'u8[16384]{0}', space=vmem, size = 0x4000, scoped, tag = 'output window, operand 0, single buffered']
    %10 = vsyncpa [#allocation3], 0
    %11 = vsyncpa [#allocation6], 0
    %12 = vsyncpa [#allocation4], 0
    // Predicated region
    $region2: #{tpu_custom_call.1} parent=1 // pred_check
      _
    $region3: #{tpu_custom_call.1} parent=1 // pred_check_branch
      %14 = sbr.rel (0) target = $region5
    $region4: #{tpu_custom_call.1} parent=1 // pred_region
      %s16 = ssub.s32 1024, 1024
      %17 = vsyncadd [#allocation3], %s16
      %s18 = sshll.u32 [#allocation2], 4
      %s19 = int_to_ptr.vmem [resolvable:$true] %s18
      %24 = dma.hbm_to_vmem [thread:$0]  %s0, 1024, %s19, [#allocation3], 256, 256, 16
    $region5: #{tpu_custom_call.1} parent=1 // pred_fallthru
      _
    // Predicated region
    $region6: #{tpu_custom_call.1} parent=1 // pred_check
      _
    $region7: #{tpu_custom_call.1} parent=1 // pred_check_branch
      %26 = sbr.rel (0) target = $region9
    $region8: #{tpu_custom_call.1} parent=1 // pred_region
      %s28 = ssub.s32 16384, 16384
      %29 = vsyncadd [#allocation6], %s28
      %s30 = sshll.u32 [#allocation5], 4
      %s31 = int_to_ptr.vmem [resolvable:$true] %s30
      %36 = dma.hbm_to_vmem [thread:$0]  %s1, 16384, %s31, [#allocation6], 512, 512, 32
    $region9: #{tpu_custom_call.1} parent=1 // pred_fallthru
      _
    // Predicated region
    $region10: #{tpu_custom_call.1} parent=1 // pred_check
      _
    $region11: #{tpu_custom_call.1} parent=1 // pred_check_branch
      %38 = sbr.rel (0) target = $region13
    $region12: #{tpu_custom_call.1} parent=1 // pred_region
      _
    $region13: #{tpu_custom_call.1} parent=1 // pred_fallthru
      _
    // Predicated region
    $region14: #{tpu_custom_call.1} parent=1 // pred_check
      _
    $region15: #{tpu_custom_call.1} parent=1 // pred_check_branch
      %40 = sbr.rel (0) target = $region17
    $region16: #{tpu_custom_call.1} parent=1 // pred_region
      %s42 = ssub.s32 8192, 8192
      %43 = vsyncadd [#allocation6], %s42
      %s44 = sshll.u32 [#allocation7], 4
      %s45 = int_to_ptr.vmem [resolvable:$true] %s44
      %50 = dma.hbm_to_vmem [thread:$0]  %s3, 8192, %s45, [#allocation6], 128, 128, 8
    $region17: #{tpu_custom_call.1} parent=1 // pred_fallthru
      _
    // Predicated region
    $region18: #{tpu_custom_call.1} parent=1 // pred_check
      _
    $region19: #{tpu_custom_call.1} parent=1 // pred_check_branch
      %52 = sbr.rel (0) target = $region21
    $region20: #{tpu_custom_call.1} parent=1 // pred_region
      _
    $region21: #{tpu_custom_call.1} parent=1 // pred_fallthru
      _
    // Predicated region
    $region22: #{tpu_custom_call.1} parent=1 // pred_check
      _
    $region23: #{tpu_custom_call.1} parent=1 // pred_check_branch
      %54 = sbr.rel (0) target = $region25
    $region24: #{tpu_custom_call.1} parent=1 // pred_region
      %55 = dma.done [#allocation3], 1024
    $region25: #{tpu_custom_call.1} parent=1 // pred_fallthru
      _
    // Predicated region
    $region26: #{tpu_custom_call.1} parent=1 // pred_check
      _
    $region27: #{tpu_custom_call.1} parent=1 // pred_check_branch
      %57 = sbr.rel (0) target = $region29
    $region28: #{tpu_custom_call.1} parent=1 // pred_region
      %58 = dma.done [#allocation6], 16384
    $region29: #{tpu_custom_call.1} parent=1 // pred_fallthru
      _
    // Predicated region
    $region30: #{tpu_custom_call.1} parent=1 // pred_check
      _
    $region31: #{tpu_custom_call.1} parent=1 // pred_check_branch
      %60 = sbr.rel (0) target = $region33
    $region32: #{tpu_custom_call.1} parent=1 // pred_region
      %61 = dma.done [#allocation6], 8192
    $region33: #{tpu_custom_call.1} parent=1 // pred_fallthru
      _
    %v62 = vld [vmem:[#allocation2] sm:$0xff]
    %v63 = vld [vmem:[#allocation2 + $0x8] sm:$0xff]
    %v64 = vld [vmem:[#allocation2 + $0x10] sm:$0xff]
    %v65 = vld [vmem:[#allocation2 + $0x18] sm:$0xff]
    %v66 = vld [vmem:[#allocation2 + $0x20] sm:$0xff]
    %v67 = vld [vmem:[#allocation2 + $0x28] sm:$0xff]
    %v68 = vld [vmem:[#allocation2 + $0x30] sm:$0xff]
    %v69 = vld [vmem:[#allocation2 + $0x38] sm:$0xff]
    %v70 = vld [vmem:[#allocation5] sm:$0xff]
    %v71 = vld [vmem:[#allocation5 + $0x8] sm:$0xff]
    %v72 = vld [vmem:[#allocation5 + $0x10] sm:$0xff]
    %v73 = vld [vmem:[#allocation5 + $0x18] sm:$0xff]
    %v74 = vld [vmem:[#allocation5 + $0x20] sm:$0xff]
    %v75 = vld [vmem:[#allocation5 + $0x28] sm:$0xff]
    %v76 = vld [vmem:[#allocation5 + $0x30] sm:$0xff]
    %v77 = vld [vmem:[#allocation5 + $0x38] sm:$0xff]
    %v78 = vld [vmem:[#allocation5 + $0x40] sm:$0xff]
    %v79 = vld [vmem:[#allocation5 + $0x48] sm:$0xff]
    %v80 = vld [vmem:[#allocation5 + $0x50] sm:$0xff]
    %v81 = vld [vmem:[#allocation5 + $0x58] sm:$0xff]
    %v82 = vld [vmem:[#allocation5 + $0x60] sm:$0xff]
    %v83 = vld [vmem:[#allocation5 + $0x68] sm:$0xff]
    %v84 = vld [vmem:[#allocation5 + $0x70] sm:$0xff]
    %v85 = vld [vmem:[#allocation5 + $0x78] sm:$0xff]
    %v86 = vld [vmem:[#allocation5 + $0x80] sm:$0xff]
    %v87 = vld [vmem:[#allocation5 + $0x88] sm:$0xff]
    %v88 = vld [vmem:[#allocation5 + $0x90] sm:$0xff]
    %v89 = vld [vmem:[#allocation5 + $0x98] sm:$0xff]
    %v90 = vld [vmem:[#allocation5 + $0xa0] sm:$0xff]
    %v91 = vld [vmem:[#allocation5 + $0xa8] sm:$0xff]
    %v92 = vld [vmem:[#allocation5 + $0xb0] sm:$0xff]
    %v93 = vld [vmem:[#allocation5 + $0xb8] sm:$0xff]
    %v94 = vld [vmem:[#allocation5 + $0xc0] sm:$0xff]
    %v95 = vld [vmem:[#allocation5 + $0xc8] sm:$0xff]
    %v96 = vld [vmem:[#allocation5 + $0xd0] sm:$0xff]
    %v97 = vld [vmem:[#allocation5 + $0xd8] sm:$0xff]
    %v98 = vld [vmem:[#allocation5 + $0xe0] sm:$0xff]
    %v99 = vld [vmem:[#allocation5 + $0xe8] sm:$0xff]
    %v100 = vld [vmem:[#allocation5 + $0xf0] sm:$0xff]
    %v101 = vld [vmem:[#allocation5 + $0xf8] sm:$0xff]
    %v102 = vld [vmem:[#allocation5 + $0x100] sm:$0xff]
    %v103 = vld [vmem:[#allocation5 + $0x108] sm:$0xff]
    %v104 = vld [vmem:[#allocation5 + $0x110] sm:$0xff]
    %v105 = vld [vmem:[#allocation5 + $0x118] sm:$0xff]
    %v106 = vld [vmem:[#allocation5 + $0x120] sm:$0xff]
    %v107 = vld [vmem:[#allocation5 + $0x128] sm:$0xff]
    %v108 = vld [vmem:[#allocation5 + $0x130] sm:$0xff]
    %v109 = vld [vmem:[#allocation5 + $0x138] sm:$0xff]
    %v110 = vld [vmem:[#allocation5 + $0x140] sm:$0xff]
    %v111 = vld [vmem:[#allocation5 + $0x148] sm:$0xff]
    %v112 = vld [vmem:[#allocation5 + $0x150] sm:$0xff]
    %v113 = vld [vmem:[#allocation5 + $0x158] sm:$0xff]
    %v114 = vld [vmem:[#allocation5 + $0x160] sm:$0xff]
    %v115 = vld [vmem:[#allocation5 + $0x168] sm:$0xff]
    %v116 = vld [vmem:[#allocation5 + $0x170] sm:$0xff]
    %v117 = vld [vmem:[#allocation5 + $0x178] sm:$0xff]
    %v118 = vld [vmem:[#allocation5 + $0x180] sm:$0xff]
    %v119 = vld [vmem:[#allocation5 + $0x188] sm:$0xff]
    %v120 = vld [vmem:[#allocation5 + $0x190] sm:$0xff]
    %v121 = vld [vmem:[#allocation5 + $0x198] sm:$0xff]
    %v122 = vld [vmem:[#allocation5 + $0x1a0] sm:$0xff]
    %v123 = vld [vmem:[#allocation5 + $0x1a8] sm:$0xff]
    %v124 = vld [vmem:[#allocation5 + $0x1b0] sm:$0xff]
    %v125 = vld [vmem:[#allocation5 + $0x1b8] sm:$0xff]
    %v126 = vld [vmem:[#allocation5 + $0x1c0] sm:$0xff]
    %v127 = vld [vmem:[#allocation5 + $0x1c8] sm:$0xff]
    %v128 = vld [vmem:[#allocation5 + $0x1d0] sm:$0xff]
    %v129 = vld [vmem:[#allocation5 + $0x1d8] sm:$0xff]
    %v130 = vld [vmem:[#allocation5 + $0x1e0] sm:$0xff]
    %v131 = vld [vmem:[#allocation5 + $0x1e8] sm:$0xff]
    %v132 = vld [vmem:[#allocation5 + $0x1f0] sm:$0xff]
    %v133 = vld [vmem:[#allocation5 + $0x1f8] sm:$0xff]
    %v134 = vld [vmem:[#allocation5 + $0x200] sm:$0xff]
    %v135 = vld [vmem:[#allocation5 + $0x208] sm:$0xff]
    %v136 = vld [vmem:[#allocation5 + $0x210] sm:$0xff]
    %v137 = vld [vmem:[#allocation5 + $0x218] sm:$0xff]
    %v138 = vld [vmem:[#allocation5 + $0x220] sm:$0xff]
    %v139 = vld [vmem:[#allocation5 + $0x228] sm:$0xff]
    %v140 = vld [vmem:[#allocation5 + $0x230] sm:$0xff]
    %v141 = vld [vmem:[#allocation5 + $0x238] sm:$0xff]
    %v142 = vld [vmem:[#allocation5 + $0x240] sm:$0xff]
    %v143 = vld [vmem:[#allocation5 + $0x248] sm:$0xff]
    %v144 = vld [vmem:[#allocation5 + $0x250] sm:$0xff]
    %v145 = vld [vmem:[#allocation5 + $0x258] sm:$0xff]
    %v146 = vld [vmem:[#allocation5 + $0x260] sm:$0xff]
    %v147 = vld [vmem:[#allocation5 + $0x268] sm:$0xff]
    %v148 = vld [vmem:[#allocation5 + $0x270] sm:$0xff]
    %v149 = vld [vmem:[#allocation5 + $0x278] sm:$0xff]
    %v150 = vld [vmem:[#allocation5 + $0x280] sm:$0xff]
    %v151 = vld [vmem:[#allocation5 + $0x288] sm:$0xff]
    %v152 = vld [vmem:[#allocation5 + $0x290] sm:$0xff]
    %v153 = vld [vmem:[#allocation5 + $0x298] sm:$0xff]
    %v154 = vld [vmem:[#allocation5 + $0x2a0] sm:$0xff]
    %v155 = vld [vmem:[#allocation5 + $0x2a8] sm:$0xff]
    %v156 = vld [vmem:[#allocation5 + $0x2b0] sm:$0xff]
    %v157 = vld [vmem:[#allocation5 + $0x2b8] sm:$0xff]
    %v158 = vld [vmem:[#allocation5 + $0x2c0] sm:$0xff]
    %v159 = vld [vmem:[#allocation5 + $0x2c8] sm:$0xff]
    %v160 = vld [vmem:[#allocation5 + $0x2d0] sm:$0xff]
    %v161 = vld [vmem:[#allocation5 + $0x2d8] sm:$0xff]
    %v162 = vld [vmem:[#allocation5 + $0x2e0] sm:$0xff]
    %v163 = vld [vmem:[#allocation5 + $0x2e8] sm:$0xff]
    %v164 = vld [vmem:[#allocation5 + $0x2f0] sm:$0xff]
    %v165 = vld [vmem:[#allocation5 + $0x2f8] sm:$0xff]
    %v166 = vld [vmem:[#allocation5 + $0x300] sm:$0xff]
    %v167 = vld [vmem:[#allocation5 + $0x308] sm:$0xff]
    %v168 = vld [vmem:[#allocation5 + $0x310] sm:$0xff]
    %v169 = vld [vmem:[#allocation5 + $0x318] sm:$0xff]
    %v170 = vld [vmem:[#allocation5 + $0x320] sm:$0xff]
    %v171 = vld [vmem:[#allocation5 + $0x328] sm:$0xff]
    %v172 = vld [vmem:[#allocation5 + $0x330] sm:$0xff]
    %v173 = vld [vmem:[#allocation5 + $0x338] sm:$0xff]
    %v174 = vld [vmem:[#allocation5 + $0x340] sm:$0xff]
    %v175 = vld [vmem:[#allocation5 + $0x348] sm:$0xff]
    %v176 = vld [vmem:[#allocation5 + $0x350] sm:$0xff]
    %v177 = vld [vmem:[#allocation5 + $0x358] sm:$0xff]
    %v178 = vld [vmem:[#allocation5 + $0x360] sm:$0xff]
    %v179 = vld [vmem:[#allocation5 + $0x368] sm:$0xff]
    %v180 = vld [vmem:[#allocation5 + $0x370] sm:$0xff]
    %v181 = vld [vmem:[#allocation5 + $0x378] sm:$0xff]
    %v182 = vld [vmem:[#allocation5 + $0x380] sm:$0xff]
    %v183 = vld [vmem:[#allocation5 + $0x388] sm:$0xff]
    %v184 = vld [vmem:[#allocation5 + $0x390] sm:$0xff]
    %v185 = vld [vmem:[#allocation5 + $0x398] sm:$0xff]
    %v186 = vld [vmem:[#allocation5 + $0x3a0] sm:$0xff]
    %v187 = vld [vmem:[#allocation5 + $0x3a8] sm:$0xff]
    %v188 = vld [vmem:[#allocation5 + $0x3b0] sm:$0xff]
    %v189 = vld [vmem:[#allocation5 + $0x3b8] sm:$0xff]
    %v190 = vld [vmem:[#allocation5 + $0x3c0] sm:$0xff]
    %v191 = vld [vmem:[#allocation5 + $0x3c8] sm:$0xff]
    %v192 = vld [vmem:[#allocation5 + $0x3d0] sm:$0xff]
    %v193 = vld [vmem:[#allocation5 + $0x3d8] sm:$0xff]
    %v194 = vld [vmem:[#allocation5 + $0x3e0] sm:$0xff]
    %v195 = vld [vmem:[#allocation5 + $0x3e8] sm:$0xff]
    %v196 = vld [vmem:[#allocation5 + $0x3f0] sm:$0xff]
    %v197 = vld [vmem:[#allocation5 + $0x3f8] sm:$0xff]
    %v198 = vld [vmem:[%s2] sm:$0xf]
    %v200 = vlaneseq
    %v201 = vshrl.u32 %v200, 7
    %v202 = vsub.s32 0, %v201
    %v203 = vrot.slane %v198, %v202
    %v204 = vlaneseq
    %v205 = vshrl.u32 %v204, 7
    %v206 = vsub.s32 1, %v205
    %v207 = vrot.slane %v198, %v206
    %v208 = vlaneseq
    %v209 = vshrl.u32 %v208, 7
    %v210 = vsub.s32 2, %v209
    %v211 = vrot.slane %v198, %v210
    %v212 = vlaneseq
    %v213 = vshrl.u32 %v212, 7
    %v214 = vsub.s32 3, %v213
    %v215 = vrot.slane %v198, %v214
    %220 = vmatprep.subr.mxu0 %v71
    %221 = vmatpush1.msra.mxu0 %v70
    %222 = vmatprep.subr.mxu0 %v75
    %223 = vmatpush1.msra.mxu0 %v74
    %224 = vmatprep.subr.mxu0 %v79
    %225 = vmatpush1.msra.mxu0 %v78
    %226 = vmatprep.subr.mxu0 %v83
    %227 = vmatpush1.msra.mxu0 %v82
    %228 = vmatprep.subr.mxu0 %v87
    %229 = vmatpush1.msra.mxu0 %v86
    %230 = vmatprep.subr.mxu0 %v91
    %231 = vmatpush1.msra.mxu0 %v90
    %232 = vmatprep.subr.mxu0 %v95
    %233 = vmatpush1.msra.mxu0 %v94
    %234 = vmatprep.subr.mxu0 %v99
    %235 = vmatpush1.msra.mxu0 %v98
    %236 = vmatprep.subr.mxu0 %v103
    %237 = vmatpush1.msra.mxu0 %v102
    %238 = vmatprep.subr.mxu0 %v107
    %239 = vmatpush1.msra.mxu0 %v106
    %240 = vmatprep.subr.mxu0 %v111
    %241 = vmatpush1.msra.mxu0 %v110
    %242 = vmatprep.subr.mxu0 %v115
    %243 = vmatpush1.msra.mxu0 %v114
    %244 = vmatprep.subr.mxu0 %v119
    %245 = vmatpush1.msra.mxu0 %v118
    %246 = vmatprep.subr.mxu0 %v123
    %247 = vmatpush1.msra.mxu0 %v122
    %248 = vmatprep.subr.mxu0 %v127
    %249 = vmatpush1.msra.mxu0 %v126
    %250 = vmatprep.subr.mxu0 %v131
    %251 = vmatpush1.msra.mxu0 %v130
    %252 = vmatprep.subr.mxu0 %v135
    %253 = vmatpush1.msra.mxu0 %v134
    %254 = vmatprep.subr.mxu0 %v139
    %255 = vmatpush1.msra.mxu0 %v138
    %256 = vmatprep.subr.mxu0 %v143
    %257 = vmatpush1.msra.mxu0 %v142
    %258 = vmatprep.subr.mxu0 %v147
    %259 = vmatpush1.msra.mxu0 %v146
    %260 = vmatprep.subr.mxu0 %v151
    %261 = vmatpush1.msra.mxu0 %v150
    %262 = vmatprep.subr.mxu0 %v155
    %263 = vmatpush1.msra.mxu0 %v154
    %264 = vmatprep.subr.mxu0 %v159
    %265 = vmatpush1.msra.mxu0 %v158
    %266 = vmatprep.subr.mxu0 %v163
    %267 = vmatpush1.msra.mxu0 %v162
    %268 = vmatprep.subr.mxu0 %v167
    %269 = vmatpush1.msra.mxu0 %v166
    %270 = vmatprep.subr.mxu0 %v171
    %271 = vmatpush1.msra.mxu0 %v170
    %272 = vmatprep.subr.mxu0 %v175
    %273 = vmatpush1.msra.mxu0 %v174
    %274 = vmatprep.subr.mxu0 %v179
    %275 = vmatpush1.msra.mxu0 %v178
    %276 = vmatprep.subr.mxu0 %v183
    %277 = vmatpush1.msra.mxu0 %v182
    %278 = vmatprep.subr.mxu0 %v187
    %279 = vmatpush1.msra.mxu0 %v186
    %280 = vmatprep.subr.mxu0 %v191
    %281 = vmatpush1.msra.mxu0 %v190
    %282 = vmatprep.subr.mxu0 %v195
    %283 = vmatpush1.msra.mxu0 %v194
    %284 = vmatprep.mubr.f32.mxu0 %v63
    %285 = vmatmul.mubr.f32.gmra.mrb[0].mxu0 %v62
    %v286 = vpop.f32.mrb[0].mxu0
    %v287 = vadd.f32 %v203, %v286
    %v288 = vpop.f32.mrb[0].mxu0
    %v289 = vadd.f32 %v207, %v288
    %290 = vmatprep.mubr.f32.mxu0 %v65
    %291 = vmatmul.mubr.f32.gmra.mrb[0].mxu0 %v64
    %v292 = vpop.f32.mrb[0].mxu0
    %v293 = vadd.f32 %v203, %v292
    %v294 = vpop.f32.mrb[0].mxu0
    %v295 = vadd.f32 %v207, %v294
    %296 = vmatprep.mubr.f32.mxu0 %v67
    %297 = vmatmul.mubr.f32.gmra.mrb[0].mxu0 %v66
    %v298 = vpop.f32.mrb[0].mxu0
    %v299 = vadd.f32 %v203, %v298
    %v300 = vpop.f32.mrb[0].mxu0
    %v301 = vadd.f32 %v207, %v300
    %302 = vmatprep.mubr.f32.mxu0 %v69
    %303 = vmatmul.mubr.f32.gmra.mrb[0].mxu0 %v68
    %v304 = vpop.f32.mrb[0].mxu0
    %v305 = vadd.f32 %v203, %v304
    %v306 = vpop.f32.mrb[0].mxu0
    %v307 = vadd.f32 %v207, %v306
    %308 = vdwg.mxu0
    %309 = vmatprep.subr.mxu0 %v73
    %310 = vmatpush1.msra.mxu0 %v72
    %311 = vmatprep.subr.mxu0 %v77
    %312 = vmatpush1.msra.mxu0 %v76
    %313 = vmatprep.subr.mxu0 %v81
    %314 = vmatpush1.msra.mxu0 %v80
    %315 = vmatprep.subr.mxu0 %v85
    %316 = vmatpush1.msra.mxu0 %v84
    %317 = vmatprep.subr.mxu0 %v89
    %318 = vmatpush1.msra.mxu0 %v88
    %319 = vmatprep.subr.mxu0 %v93
    %320 = vmatpush1.msra.mxu0 %v92
    %321 = vmatprep.subr.mxu0 %v97
    %322 = vmatpush1.msra.mxu0 %v96
    %323 = vmatprep.subr.mxu0 %v101
    %324 = vmatpush1.msra.mxu0 %v100
    %325 = vmatprep.subr.mxu0 %v105
    %326 = vmatpush1.msra.mxu0 %v104
    %327 = vmatprep.subr.mxu0 %v109
    %328 = vmatpush1.msra.mxu0 %v108
    %329 = vmatprep.subr.mxu0 %v113
    %330 = vmatpush1.msra.mxu0 %v112
    %331 = vmatprep.subr.mxu0 %v117
    %332 = vmatpush1.msra.mxu0 %v116
    %333 = vmatprep.subr.mxu0 %v121
    %334 = vmatpush1.msra.mxu0 %v120
    %335 = vmatprep.subr.mxu0 %v125
    %336 = vmatpush1.msra.mxu0 %v124
    %337 = vmatprep.subr.mxu0 %v129
    %338 = vmatpush1.msra.mxu0 %v128
    %339 = vmatprep.subr.mxu0 %v133
    %340 = vmatpush1.msra.mxu0 %v132
    %341 = vmatprep.subr.mxu0 %v137
    %342 = vmatpush1.msra.mxu0 %v136
    %343 = vmatprep.subr.mxu0 %v141
    %344 = vmatpush1.msra.mxu0 %v140
    %345 = vmatprep.subr.mxu0 %v145
    %346 = vmatpush1.msra.mxu0 %v144
    %347 = vmatprep.subr.mxu0 %v149
    %348 = vmatpush1.msra.mxu0 %v148
    %349 = vmatprep.subr.mxu0 %v153
    %350 = vmatpush1.msra.mxu0 %v152
    %351 = vmatprep.subr.mxu0 %v157
    %352 = vmatpush1.msra.mxu0 %v156
    %353 = vmatprep.subr.mxu0 %v161
    %354 = vmatpush1.msra.mxu0 %v160
    %355 = vmatprep.subr.mxu0 %v165
    %356 = vmatpush1.msra.mxu0 %v164
    %357 = vmatprep.subr.mxu0 %v169
    %358 = vmatpush1.msra.mxu0 %v168
    %359 = vmatprep.subr.mxu0 %v173
    %360 = vmatpush1.msra.mxu0 %v172
    %361 = vmatprep.subr.mxu0 %v177
    %362 = vmatpush1.msra.mxu0 %v176
    %363 = vmatprep.subr.mxu0 %v181
    %364 = vmatpush1.msra.mxu0 %v180
    %365 = vmatprep.subr.mxu0 %v185
    %366 = vmatpush1.msra.mxu0 %v184
    %367 = vmatprep.subr.mxu0 %v189
    %368 = vmatpush1.msra.mxu0 %v188
    %369 = vmatprep.subr.mxu0 %v193
    %370 = vmatpush1.msra.mxu0 %v192
    %371 = vmatprep.subr.mxu0 %v197
    %372 = vmatpush1.msra.mxu0 %v196
    %373 = vmatprep.mubr.f32.mxu0 %v63
    %374 = vmatmul.mubr.f32.gmra.mrb[0].mxu0 %v62
    %v375 = vpop.f32.mrb[0].mxu0
    %v376 = vadd.f32 %v211, %v375
    %v377 = vpop.f32.mrb[0].mxu0
    %v378 = vadd.f32 %v215, %v377
    %379 = vmatprep.mubr.f32.mxu0 %v65
    %380 = vmatmul.mubr.f32.gmra.mrb[0].mxu0 %v64
    %v381 = vpop.f32.mrb[0].mxu0
    %v382 = vadd.f32 %v211, %v381
    %v383 = vpop.f32.mrb[0].mxu0
    %v384 = vadd.f32 %v215, %v383
    %385 = vmatprep.mubr.f32.mxu0 %v67
    %386 = vmatmul.mubr.f32.gmra.mrb[0].mxu0 %v66
    %v387 = vpop.f32.mrb[0].mxu0
    %v388 = vadd.f32 %v211, %v387
    %v389 = vpop.f32.mrb[0].mxu0
    %v390 = vadd.f32 %v215, %v389
    %391 = vmatprep.mubr.f32.mxu0 %v69
    %392 = vmatmul.mubr.f32.gmra.mrb[0].mxu0 %v68
    %v393 = vpop.f32.mrb[0].mxu0
    %v394 = vadd.f32 %v211, %v393
    %v395 = vpop.f32.mrb[0].mxu0
    %v396 = vadd.f32 %v215, %v395
    %397 = vdwg.mxu0
    %v398 = vmax.f32 %v287, 0.0
    %v399 = vmax.f32 %v289, 0.0
    %v400 = vmax.f32 %v376, 0.0
    %v401 = vmax.f32 %v378, 0.0
    %v402 = vmax.f32 %v293, 0.0
    %v403 = vmax.f32 %v295, 0.0
    %v404 = vmax.f32 %v382, 0.0
    %v405 = vmax.f32 %v384, 0.0
    %v406 = vmax.f32 %v299, 0.0
    %v407 = vmax.f32 %v301, 0.0
    %v408 = vmax.f32 %v388, 0.0
    %v409 = vmax.f32 %v390, 0.0
    %v410 = vmax.f32 %v305, 0.0
    %v411 = vmax.f32 %v307, 0.0
    %v412 = vmax.f32 %v394, 0.0
    %v413 = vmax.f32 %v396, 0.0
    %v414 = vld [vmem:[#allocation7] sm:$0xff]
    %v415 = vld [vmem:[#allocation7 + $0x8] sm:$0xff]
    %v416 = vld [vmem:[#allocation7 + $0x10] sm:$0xff]
    %v417 = vld [vmem:[#allocation7 + $0x18] sm:$0xff]
    %v418 = vld [vmem:[#allocation7 + $0x20] sm:$0xff]
    %v419 = vld [vmem:[#allocation7 + $0x28] sm:$0xff]
    %v420 = vld [vmem:[#allocation7 + $0x30] sm:$0xff]
    %v421 = vld [vmem:[#allocation7 + $0x38] sm:$0xff]
    %v422 = vld [vmem:[#allocation7 + $0x40] sm:$0xff]
    %v423 = vld [vmem:[#allocation7 + $0x48] sm:$0xff]
    %v424 = vld [vmem:[#allocation7 + $0x50] sm:$0xff]
    %v425 = vld [vmem:[#allocation7 + $0x58] sm:$0xff]
    %v426 = vld [vmem:[#allocation7 + $0x60] sm:$0xff]
    %v427 = vld [vmem:[#allocation7 + $0x68] sm:$0xff]
    %v428 = vld [vmem:[#allocation7 + $0x70] sm:$0xff]
    %v429 = vld [vmem:[#allocation7 + $0x78] sm:$0xff]
    %v430 = vld [vmem:[#allocation7 + $0x80] sm:$0xff]
    %v431 = vld [vmem:[#allocation7 + $0x88] sm:$0xff]
    %v432 = vld [vmem:[#allocation7 + $0x90] sm:$0xff]
    %v433 = vld [vmem:[#allocation7 + $0x98] sm:$0xff]
    %v434 = vld [vmem:[#allocation7 + $0xa0] sm:$0xff]
    %v435 = vld [vmem:[#allocation7 + $0xa8] sm:$0xff]
    %v436 = vld [vmem:[#allocation7 + $0xb0] sm:$0xff]
    %v437 = vld [vmem:[#allocation7 + $0xb8] sm:$0xff]
    %v438 = vld [vmem:[#allocation7 + $0xc0] sm:$0xff]
    %v439 = vld [vmem:[#allocation7 + $0xc8] sm:$0xff]
    %v440 = vld [vmem:[#allocation7 + $0xd0] sm:$0xff]
    %v441 = vld [vmem:[#allocation7 + $0xd8] sm:$0xff]
    %v442 = vld [vmem:[#allocation7 + $0xe0] sm:$0xff]
    %v443 = vld [vmem:[#allocation7 + $0xe8] sm:$0xff]
    %v444 = vld [vmem:[#allocation7 + $0xf0] sm:$0xff]
    %v445 = vld [vmem:[#allocation7 + $0xf8] sm:$0xff]
    %v446 = vld [vmem:[#allocation7 + $0x100] sm:$0xff]
    %v447 = vld [vmem:[#allocation7 + $0x108] sm:$0xff]
    %v448 = vld [vmem:[#allocation7 + $0x110] sm:$0xff]
    %v449 = vld [vmem:[#allocation7 + $0x118] sm:$0xff]
    %v450 = vld [vmem:[#allocation7 + $0x120] sm:$0xff]
    %v451 = vld [vmem:[#allocation7 + $0x128] sm:$0xff]
    %v452 = vld [vmem:[#allocation7 + $0x130] sm:$0xff]
    %v453 = vld [vmem:[#allocation7 + $0x138] sm:$0xff]
    %v454 = vld [vmem:[#allocation7 + $0x140] sm:$0xff]
    %v455 = vld [vmem:[#allocation7 + $0x148] sm:$0xff]
    %v456 = vld [vmem:[#allocation7 + $0x150] sm:$0xff]
    %v457 = vld [vmem:[#allocation7 + $0x158] sm:$0xff]
    %v458 = vld [vmem:[#allocation7 + $0x160] sm:$0xff]
    %v459 = vld [vmem:[#allocation7 + $0x168] sm:$0xff]
    %v460 = vld [vmem:[#allocation7 + $0x170] sm:$0xff]
    %v461 = vld [vmem:[#allocation7 + $0x178] sm:$0xff]
    %v462 = vld [vmem:[#allocation7 + $0x180] sm:$0xff]
    %v463 = vld [vmem:[#allocation7 + $0x188] sm:$0xff]
    %v464 = vld [vmem:[#allocation7 + $0x190] sm:$0xff]
    %v465 = vld [vmem:[#allocation7 + $0x198] sm:$0xff]
    %v466 = vld [vmem:[#allocation7 + $0x1a0] sm:$0xff]
    %v467 = vld [vmem:[#allocation7 + $0x1a8] sm:$0xff]
    %v468 = vld [vmem:[#allocation7 + $0x1b0] sm:$0xff]
    %v469 = vld [vmem:[#allocation7 + $0x1b8] sm:$0xff]
    %v470 = vld [vmem:[#allocation7 + $0x1c0] sm:$0xff]
    %v471 = vld [vmem:[#allocation7 + $0x1c8] sm:$0xff]
    %v472 = vld [vmem:[#allocation7 + $0x1d0] sm:$0xff]
    %v473 = vld [vmem:[#allocation7 + $0x1d8] sm:$0xff]
    %v474 = vld [vmem:[#allocation7 + $0x1e0] sm:$0xff]
    %v475 = vld [vmem:[#allocation7 + $0x1e8] sm:$0xff]
    %v476 = vld [vmem:[#allocation7 + $0x1f0] sm:$0xff]
    %v477 = vld [vmem:[#allocation7 + $0x1f8] sm:$0xff]
    %v478 = vld [vmem:[%s4] sm:$0x1]
    %v480 = vlaneseq
    %v481 = vshrl.u32 %v480, 7
    %v482 = vsub.s32 0, %v481
    %v483 = vrot.slane %v478, %v482
    %485 = vmatprep.subr.mxu0 0.0
    %486 = vmatpush1.msra.mxu0 %v414
    %487 = vmatprep.subr.mxu0 0.0
    %488 = vmatpush1.msra.mxu0 %v415
    %489 = vmatprep.subr.mxu0 0.0
    %490 = vmatpush1.msra.mxu0 %v416
    %491 = vmatprep.subr.mxu0 0.0
    %492 = vmatpush1.msra.mxu0 %v417
    %493 = vmatprep.subr.mxu0 0.0
    %494 = vmatpush1.msra.mxu0 %v418
    %495 = vmatprep.subr.mxu0 0.0
    %496 = vmatpush1.msra.mxu0 %v419
    %497 = vmatprep.subr.mxu0 0.0
    %498 = vmatpush1.msra.mxu0 %v420
    %499 = vmatprep.subr.mxu0 0.0
    %500 = vmatpush1.msra.mxu0 %v421
    %501 = vmatprep.subr.mxu0 0.0
    %502 = vmatpush1.msra.mxu0 %v422
    %503 = vmatprep.subr.mxu0 0.0
    %504 = vmatpush1.msra.mxu0 %v423
    %505 = vmatprep.subr.mxu0 0.0
    %506 = vmatpush1.msra.mxu0 %v424
    %507 = vmatprep.subr.mxu0 0.0
    %508 = vmatpush1.msra.mxu0 %v425
    %509 = vmatprep.subr.mxu0 0.0
    %510 = vmatpush1.msra.mxu0 %v426
    %511 = vmatprep.subr.mxu0 0.0
    %512 = vmatpush1.msra.mxu0 %v427
    %513 = vmatprep.subr.mxu0 0.0
    %514 = vmatpush1.msra.mxu0 %v428
    %515 = vmatprep.subr.mxu0 0.0
    %516 = vmatpush1.msra.mxu0 %v429
    %517 = vmatprep.subr.mxu0 0.0
    %518 = vmatpush1.msra.mxu0 %v430
    %519 = vmatprep.subr.mxu0 0.0
    %520 = vmatpush1.msra.mxu0 %v431
    %521 = vmatprep.subr.mxu0 0.0
    %522 = vmatpush1.msra.mxu0 %v432
    %523 = vmatprep.subr.mxu0 0.0
    %524 = vmatpush1.msra.mxu0 %v433
    %525 = vmatprep.subr.mxu0 0.0
    %526 = vmatpush1.msra.mxu0 %v434
    %527 = vmatprep.subr.mxu0 0.0
    %528 = vmatpush1.msra.mxu0 %v435
    %529 = vmatprep.subr.mxu0 0.0
    %530 = vmatpush1.msra.mxu0 %v436
    %531 = vmatprep.subr.mxu0 0.0
    %532 = vmatpush1.msra.mxu0 %v437
    %533 = vmatprep.subr.mxu0 0.0
    %534 = vmatpush1.msra.mxu0 %v438
    %535 = vmatprep.subr.mxu0 0.0
    %536 = vmatpush1.msra.mxu0 %v439
    %537 = vmatprep.subr.mxu0 0.0
    %538 = vmatpush1.msra.mxu0 %v440
    %539 = vmatprep.subr.mxu0 0.0
    %540 = vmatpush1.msra.mxu0 %v441
    %541 = vmatprep.subr.mxu0 0.0
    %542 = vmatpush1.msra.mxu0 %v442
    %543 = vmatprep.subr.mxu0 0.0
    %544 = vmatpush1.msra.mxu0 %v443
    %545 = vmatprep.subr.mxu0 0.0
    %546 = vmatpush1.msra.mxu0 %v444
    %547 = vmatprep.subr.mxu0 0.0
    %548 = vmatpush1.msra.mxu0 %v445
    %549 = vmatprep.mubr.f32.mxu0 %v399
    %550 = vmatmul.mubr.f32.gmra.mrb[0].mxu0 %v398
    %v551 = vpop.f32.mrb[0].mxu0
    %v552 = vadd.f32 %v483, %v551
    %v553 = vpop.f32.mrb[0].mxu0
    %554 = vmatprep.mubr.f32.mxu0 %v403
    %555 = vmatmul.mubr.f32.gmra.mrb[0].mxu0 %v402
    %v556 = vpop.f32.mrb[0].mxu0
    %v557 = vadd.f32 %v483, %v556
    %v558 = vpop.f32.mrb[0].mxu0
    %559 = vmatprep.mubr.f32.mxu0 %v407
    %560 = vmatmul.mubr.f32.gmra.mrb[0].mxu0 %v406
    %v561 = vpop.f32.mrb[0].mxu0
    %v562 = vadd.f32 %v483, %v561
    %v563 = vpop.f32.mrb[0].mxu0
    %564 = vmatprep.mubr.f32.mxu0 %v411
    %565 = vmatmul.mubr.f32.gmra.mrb[0].mxu0 %v410
    %v566 = vpop.f32.mrb[0].mxu0
    %v567 = vadd.f32 %v483, %v566
    %v568 = vpop.f32.mrb[0].mxu0
    %569 = vdwg.mxu0
    %570 = vmatprep.subr.mxu0 0.0
    %571 = vmatpush1.msra.mxu0 %v446
    %572 = vmatprep.subr.mxu0 0.0
    %573 = vmatpush1.msra.mxu0 %v447
    %574 = vmatprep.subr.mxu0 0.0
    %575 = vmatpush1.msra.mxu0 %v448
    %576 = vmatprep.subr.mxu0 0.0
    %577 = vmatpush1.msra.mxu0 %v449
    %578 = vmatprep.subr.mxu0 0.0
    %579 = vmatpush1.msra.mxu0 %v450
    %580 = vmatprep.subr.mxu0 0.0
    %581 = vmatpush1.msra.mxu0 %v451
    %582 = vmatprep.subr.mxu0 0.0
    %583 = vmatpush1.msra.mxu0 %v452
    %584 = vmatprep.subr.mxu0 0.0
    %585 = vmatpush1.msra.mxu0 %v453
    %586 = vmatprep.subr.mxu0 0.0
    %587 = vmatpush1.msra.mxu0 %v454
    %588 = vmatprep.subr.mxu0 0.0
    %589 = vmatpush1.msra.mxu0 %v455
    %590 = vmatprep.subr.mxu0 0.0
    %591 = vmatpush1.msra.mxu0 %v456
    %592 = vmatprep.subr.mxu0 0.0
    %593 = vmatpush1.msra.mxu0 %v457
    %594 = vmatprep.subr.mxu0 0.0
    %595 = vmatpush1.msra.mxu0 %v458
    %596 = vmatprep.subr.mxu0 0.0
    %597 = vmatpush1.msra.mxu0 %v459
    %598 = vmatprep.subr.mxu0 0.0
    %599 = vmatpush1.msra.mxu0 %v460
    %600 = vmatprep.subr.mxu0 0.0
    %601 = vmatpush1.msra.mxu0 %v461
    %602 = vmatprep.subr.mxu0 0.0
    %603 = vmatpush1.msra.mxu0 %v462
    %604 = vmatprep.subr.mxu0 0.0
    %605 = vmatpush1.msra.mxu0 %v463
    %606 = vmatprep.subr.mxu0 0.0
    %607 = vmatpush1.msra.mxu0 %v464
    %608 = vmatprep.subr.mxu0 0.0
    %609 = vmatpush1.msra.mxu0 %v465
    %610 = vmatprep.subr.mxu0 0.0
    %611 = vmatpush1.msra.mxu0 %v466
    %612 = vmatprep.subr.mxu0 0.0
    %613 = vmatpush1.msra.mxu0 %v467
    %614 = vmatprep.subr.mxu0 0.0
    %615 = vmatpush1.msra.mxu0 %v468
    %616 = vmatprep.subr.mxu0 0.0
    %617 = vmatpush1.msra.mxu0 %v469
    %618 = vmatprep.subr.mxu0 0.0
    %619 = vmatpush1.msra.mxu0 %v470
    %620 = vmatprep.subr.mxu0 0.0
    %621 = vmatpush1.msra.mxu0 %v471
    %622 = vmatprep.subr.mxu0 0.0
    %623 = vmatpush1.msra.mxu0 %v472
    %624 = vmatprep.subr.mxu0 0.0
    %625 = vmatpush1.msra.mxu0 %v473
    %626 = vmatprep.subr.mxu0 0.0
    %627 = vmatpush1.msra.mxu0 %v474
    %628 = vmatprep.subr.mxu0 0.0
    %629 = vmatpush1.msra.mxu0 %v475
    %630 = vmatprep.subr.mxu0 0.0
    %631 = vmatpush1.msra.mxu0 %v476
    %632 = vmatprep.subr.mxu0 0.0
    %633 = vmatpush1.msra.mxu0 %v477
    %634 = vmatprep.mubr.f32.mxu0 %v401
    %635 = vmatmul.mubr.f32.gmra.mrb[0].mxu0 %v400
    %v636 = vpop.f32.mrb[0].mxu0
    %v637 = vadd.f32 %v552, %v636
    %v638 = vpop.f32.mrb[0].mxu0
    %639 = vmatprep.mubr.f32.mxu0 %v405
    %640 = vmatmul.mubr.f32.gmra.mrb[0].mxu0 %v404
    %v641 = vpop.f32.mrb[0].mxu0
    %v642 = vadd.f32 %v557, %v641
    %v643 = vpop.f32.mrb[0].mxu0
    %644 = vmatprep.mubr.f32.mxu0 %v409
    %645 = vmatmul.mubr.f32.gmra.mrb[0].mxu0 %v408
    %v646 = vpop.f32.mrb[0].mxu0
    %v647 = vadd.f32 %v562, %v646
    %v648 = vpop.f32.mrb[0].mxu0
    %649 = vmatprep.mubr.f32.mxu0 %v413
    %650 = vmatmul.mubr.f32.gmra.mrb[0].mxu0 %v412
    %v651 = vpop.f32.mrb[0].mxu0
    %v652 = vadd.f32 %v567, %v651
    %v653 = vpop.f32.mrb[0].mxu0
    %654 = vdwg.mxu0
    %v655 = vmax.f32 %v637, 0.0
    %v656 = vmax.f32 %v642, 0.0
    %v657 = vmax.f32 %v647, 0.0
    %v658 = vmax.f32 %v652, 0.0
    %659 = vst [vmem:[#allocation8] sm:$0xff] %v655
    %660 = vst [vmem:[#allocation8 + $0x8] sm:$0xff] %v656
    %661 = vst [vmem:[#allocation8 + $0x10] sm:$0xff] %v657
    %662 = vst [vmem:[#allocation8 + $0x18] sm:$0xff] %v658
    // Predicated region
    $region34: #{tpu_custom_call.1} parent=1 // pred_check
      _
    $region35: #{tpu_custom_call.1} parent=1 // pred_check_branch
      %664 = sbr.rel (0) target = $region37
    $region36: #{tpu_custom_call.1} parent=1 // pred_region
      %s666 = ssub.s32 512, 512
      %667 = vsyncadd [#allocation4], %s666
      %s668 = sshll.u32 [#allocation8], 4
      %s669 = int_to_ptr.vmem [resolvable:$true] %s668
      %674 = dma.vmem_to_hbm [thread:$0]  %s669, 512, %s5, [#allocation4], 128, 128, 8
    $region37: #{tpu_custom_call.1} parent=1 // pred_fallthru
      _
    // Predicated region
    $region38: #{tpu_custom_call.1} parent=1 // pred_check
      _
    $region39: #{tpu_custom_call.1} parent=1 // pred_check_branch
      %676 = sbr.rel (0) target = $region41
    $region40: #{tpu_custom_call.1} parent=1 // pred_region
      %677 = dma.done [#allocation4], 512
    $region41: #{tpu_custom_call.1} parent=1 // pred_fallthru
      _
    %678 = vsyncpa [#allocation3], 1
    %679 = vsyncpa [#allocation6], 1
    %680 = vsyncpa [#allocation4], 1

</llo_original>
